<compile_context>
chip_gen: v7x
topology: tpu7x:2x2x1
jax: 0.10.0
libtpu: 0.0.40
codegen_flags: <defaults>
</compile_context>

<pallas_src>
import functools

import jax
import jax.numpy as jnp
from jax.experimental import pallas as pl
from jax.experimental.pallas import tpu as pltpu

LAMBDA_CLASS = 1.0
LAMBDA_NOOBJ = 10.0
LAMBDA_OBJ = 1.0
LAMBDA_BOX = 10.0


def _bce_with_logits(x, y):
    # numerically-stable BCEWithLogits (same formula PyTorch uses)
    return jnp.maximum(x, 0.0) - x * y + jnp.log1p(jnp.exp(-jnp.abs(x)))


def _yolo_loss_kernel(anc_ref, pred_ref, tgt_ref, out_ref, acc_ref, *, A):
    a = pl.program_id(0)          # anchor index (grid-parallel axis)
    j = pl.program_id(1)          # cell-chunk index (reduction axis)

    @pl.when(j == 0)
    def _():
        acc_ref[...] = jnp.zeros_like(acc_ref)

    # Native-dtype DMA, f32 compute in vregs.
    p = pred_ref[0].astype(jnp.float32)       # (D, TM)
    t = tgt_ref[0].astype(jnp.float32)        # (6, TM)

    # Per-anchor scalars from SMEM: [aw*A, ah*A, 1/aw*A, 1/ah*A]
    aw = anc_ref[a]
    ah = anc_ref[A + a]
    inv_aw = anc_ref[2 * A + a]
    inv_ah = anc_ref[3 * A + a]

    t0 = t[0:1, :]
    objf = (t0 == 1.0).astype(jnp.float32)
    noobjf = (t0 == 0.0).astype(jnp.float32)   # padded cells use t0 = -1 -> in neither set

    p_obj = p[0:1, :]
    px = jax.nn.sigmoid(p[1:2, :])
    py = jax.nn.sigmoid(p[2:3, :])
    pw = jnp.exp(p[3:4, :]) * aw
    ph = jnp.exp(p[4:5, :]) * ah

    tx = t[1:2, :]
    ty = t[2:3, :]
    tw = t[3:4, :]
    th = t[4:5, :]

    # midpoint-format IoU (standard YOLO intersection_over_union)
    b1x1, b1x2 = px - 0.5 * pw, px + 0.5 * pw
    b1y1, b1y2 = py - 0.5 * ph, py + 0.5 * ph
    b2x1, b2x2 = tx - 0.5 * tw, tx + 0.5 * tw
    b2y1, b2y2 = ty - 0.5 * th, ty + 0.5 * th
    inter_w = jnp.maximum(jnp.minimum(b1x2, b2x2) - jnp.maximum(b1x1, b2x1), 0.0)
    inter_h = jnp.maximum(jnp.minimum(b1y2, b2y2) - jnp.maximum(b1y1, b2y1), 0.0)
    inter = inter_w * inter_h
    area1 = jnp.abs((b1x2 - b1x1) * (b1y2 - b1y1))
    area2 = jnp.abs((b2x2 - b2x1) * (b2y2 - b2y1))
    ious = inter / (area1 + area2 - inter + 1e-6)

    # objectness / no-objectness BCE share one softplus (one exp + one log).
    # On the noobj set the target t0 is exactly 0, so its BCE reduces to the
    # softplus `base`; the obj set subtracts x*y with y = iou * t0 (t0 == 1).
    base = jnp.maximum(p_obj, 0.0) + jnp.log1p(jnp.exp(-jnp.abs(p_obj)))
    obj_bce = base - p_obj * (ious * t0)

    # box MSE terms: preds = [sigmoid(x), sigmoid(y), raw w, raw h]
    #                target = [x, y, log(1e-16 + w/aw), log(1e-16 + h/ah)]
    ltw = jnp.log(1e-16 + tw * inv_aw)
    lth = jnp.log(1e-16 + th * inv_ah)
    box_sq = ((px - tx) ** 2 + (py - ty) ** 2
              + (p[3:4, :] - ltw) ** 2 + (p[4:5, :] - lth) ** 2)

    # class cross-entropy over logits p[5:, :]
    logits = p[5:, :]                                   # (C, TM)
    cls = t[5:6, :].astype(jnp.int32)                   # (1, TM)
    iota = jax.lax.broadcasted_iota(jnp.int32, logits.shape, 0)
    onehot = (iota == cls)
    mx = jnp.max(logits, axis=0, keepdims=True)
    lse = mx + jnp.log(jnp.sum(jnp.exp(logits - mx), axis=0, keepdims=True))
    picked = jnp.sum(jnp.where(onehot, logits, 0.0), axis=0, keepdims=True)
    ce = lse - picked

    # Fold the lambdas in here so all obj-masked terms share one accumulator
    # row (class/obj/box means all divide by n_obj; box by 4*n_obj).
    obj_terms = (LAMBDA_CLASS * ce + LAMBDA_OBJ * obj_bce
                 + (0.25 * LAMBDA_BOX) * box_sq)

    # per-row accumulates (no concatenate / zero padding rows)
    acc_ref[0:1, :] += objf * obj_terms              # obj-masked weighted sums
    acc_ref[1:2, :] += (LAMBDA_NOOBJ * noobjf) * base  # noobj BCE (weighted)
    acc_ref[2:3, :] += objf                          # obj count
    acc_ref[3:4, :] += noobjf                        # noobj count

    @pl.when(j == pl.num_programs(1) - 1)
    def _():
        totals = jnp.sum(acc_ref[...], axis=1, keepdims=True)      # (8, 1)
        out_ref[...] = jnp.broadcast_to(totals[None, :, :], out_ref.shape)


def yolo_loss(predictions, target, anchors, *, tile_m=2048):
    """predictions: (N, 3, S, S, 5+C); target: (N, 3, S, S, 6); anchors: (3, 2)."""
    N, A, S1, S2, D = predictions.shape
    assert target.shape == (N, A, S1, S2, 6)
    assert anchors.shape == (A, 2)
    Mg = N * S1 * S2

    # Anchor-major, lane-dense slabs (native dtype, no f32 cast here).
    pred_r = jnp.transpose(predictions, (1, 4, 0, 2, 3)).reshape(A, D, Mg)
    tgt_r = jnp.transpose(target, (1, 4, 0, 2, 3)).reshape(A, 6, Mg)

    # Large lane tiles for long contiguous DMAs; clip so tiny problems are not
    # over-padded.  tile_m can be swept per generation (2K-8K typical).
    tm = min(tile_m, pl.cdiv(Mg, 128) * 128)
    grid_j = pl.cdiv(Mg, tm)
    Mg_pad = grid_j * tm
    pad = Mg_pad - Mg
    if pad:
        pred_r = jnp.pad(pred_r, ((0, 0), (0, 0), (0, pad)))
        tgt_r = jnp.pad(tgt_r, ((0, 0), (0, 0), (0, pad)))
        # Sentinel objness -1 so padded cells count as neither obj nor noobj.
        tgt_r = tgt_r.at[:, 0, Mg:].set(jnp.asarray(-1.0, tgt_r.dtype))

    anc = anchors.astype(jnp.float32)
    anc_params = jnp.concatenate(
        [anc[:, 0], anc[:, 1], 1.0 / anc[:, 0], 1.0 / anc[:, 1]])   # (4A,) in SMEM

    kernel = functools.partial(_yolo_loss_kernel, A=A)
    partials = pl.pallas_call(
        kernel,
        out_shape=jax.ShapeDtypeStruct((A, 8, 128), jnp.float32),
        grid_spec=pltpu.PrefetchScalarGridSpec(
            num_scalar_prefetch=0,
            grid=(A, grid_j),
            in_specs=[
                pl.BlockSpec(memory_space=pltpu.MemorySpace.SMEM),   # anchor scalars
                pl.BlockSpec((1, D, tm), lambda a, j: (a, 0, j)),
                pl.BlockSpec((1, 6, tm), lambda a, j: (a, 0, j)),
            ],
            out_specs=pl.BlockSpec((1, 8, 128), lambda a, j: (a, 0, 0)),
            scratch_shapes=[pltpu.VMEM((8, tm), jnp.float32)],
        ),
        compiler_params=pltpu.CompilerParams(
            dimension_semantics=("parallel", "arbitrary"),
            vmem_limit_bytes=32 * 1024 * 1024,
        ),
    )(anc_params, pred_r, tgt_r)

    # Tiny final combine on the host-side JAX graph (keeps the anchor axis
    # parallel across TensorCores on v7x).  Lambdas are already folded in.
    sums = jnp.sum(partials[:, :, 0], axis=0)          # (8,)
    n_obj = sums[2]
    n_noobj = sums[3]
    return sums[0] / n_obj + sums[1] / n_noobj


# ---------------- pure-JAX reference (for correctness check) ----------------
def _iou_midpoint(b1, b2):
    b1x1, b1x2 = b1[..., 0:1] - b1[..., 2:3] / 2, b1[..., 0:1] + b1[..., 2:3] / 2
    b1y1, b1y2 = b1[..., 1:2] - b1[..., 3:4] / 2, b1[..., 1:2] + b1[..., 3:4] / 2
    b2x1, b2x2 = b2[..., 0:1] - b2[..., 2:3] / 2, b2[..., 0:1] + b2[..., 2:3] / 2
    b2y1, b2y2 = b2[..., 1:2] - b2[..., 3:4] / 2, b2[..., 1:2] + b2[..., 3:4] / 2
    inter = (jnp.clip(jnp.minimum(b1x2, b2x2) - jnp.maximum(b1x1, b2x1), 0)
             * jnp.clip(jnp.minimum(b1y2, b2y2) - jnp.maximum(b1y1, b2y1), 0))
    a1 = jnp.abs((b1x2 - b1x1) * (b1y2 - b1y1))
    a2 = jnp.abs((b2x2 - b2x1) * (b2y2 - b2y1))
    return inter / (a1 + a2 - inter + 1e-6)


def yolo_loss_ref(predictions, target, anchors):
    p = predictions.astype(jnp.float32)
    t = target.astype(jnp.float32)
    objf = (t[..., 0] == 1.0).astype(jnp.float32)
    noobjf = (t[..., 0] == 0.0).astype(jnp.float32)
    n_obj, n_noobj = jnp.sum(objf), jnp.sum(noobjf)
    anc = anchors.reshape(1, 3, 1, 1, 2).astype(jnp.float32)

    logits = p[..., 5:]
    cls = t[..., 5].astype(jnp.int32)
    lse = jax.scipy.special.logsumexp(logits, axis=-1)
    picked = jnp.take_along_axis(logits, cls[..., None], axis=-1)[..., 0]
    class_loss = jnp.sum(objf * (lse - picked)) / n_obj

    box_preds = jnp.concatenate(
        [jax.nn.sigmoid(p[..., 1:3]), jnp.exp(p[..., 3:5]) * anc], axis=-1)
    ious = _iou_midpoint(box_preds, t[..., 1:5])[..., 0]
    obj_loss = jnp.sum(objf * _bce_with_logits(p[..., 0], ious * t[..., 0])) / n_obj
    noobj_loss = jnp.sum(noobjf * _bce_with_logits(p[..., 0], t[..., 0])) / n_noobj

    pred_box = jnp.concatenate([jax.nn.sigmoid(p[..., 1:3]), p[..., 3:5]], axis=-1)
    tgt_box = jnp.concatenate([t[..., 1:3], jnp.log(1e-16 + t[..., 3:5] / anc)], axis=-1)
    box_loss = jnp.sum(objf[..., None] * (pred_box - tgt_box) ** 2) / (4.0 * n_obj)

    return (LAMBDA_BOX * box_loss + LAMBDA_OBJ * obj_loss
            + LAMBDA_NOOBJ * noobj_loss + LAMBDA_CLASS * class_loss)


if __name__ == "__main__":
    N, A, S, C = 2, 3, 8, 3
    D = 5 + C
    key = jax.random.PRNGKey(0)
    kp, km, kxy, kwh, kc = jax.random.split(key, 5)

    predictions = 0.5 * jax.random.normal(kp, (N, A, S, S, D), jnp.float32)

    obj_mask = (jax.random.uniform(km, (N, A, S, S)) < 0.3).astype(jnp.float32)
    xy = jax.random.uniform(kxy, (N, A, S, S, 2), minval=0.05, maxval=0.95)
    wh = jax.random.uniform(kwh, (N, A, S, S, 2), minval=0.1, maxval=2.0)
    cls = jax.random.randint(kc, (N, A, S, S, 1), 0, C).astype(jnp.float32)
    target = jnp.concatenate([obj_mask[..., None], xy, wh, cls], axis=-1)
    target = target * obj_mask[..., None]   # zero out everything except obj cells

    anchors = jnp.array([[0.28, 0.22], [0.38, 0.48], [0.90, 0.78]], jnp.float32)

    loss = jax.block_until_ready(jax.jit(yolo_loss)(predictions, target, anchors))
    ref = yolo_loss_ref(predictions, target, anchors)
    assert bool(jnp.isfinite(loss))
    assert bool(jnp.allclose(loss, ref, rtol=1e-4, atol=1e-4))
    print("KERNEL_OK")
</pallas_src>

<mosaic_0001>
module attributes {stable_mosaic.version = 11 : i64} {
  func.func @_yolo_loss_kernel(%arg0: i32, %arg1: i32, %arg2: memref<12xf32, #tpu.memory_space<smem>>, %arg3: memref<1x8x128xf32, #tpu.memory_space<vmem>>, %arg4: memref<1x6x128xf32, #tpu.memory_space<vmem>>, %arg5: memref<1x8x128xf32, #tpu.memory_space<vmem>>, %arg6: memref<8x128xf32, #tpu.memory_space<vmem>>) attributes {dimension_semantics = [#tpu.dimension_semantics<parallel>, #tpu.dimension_semantics<arbitrary>], iteration_bounds = array<i64: 3, 1>, scalar_prefetch = 0 : i64, scratch_operands = 1 : i64, tpu.core_type = #tpu.core_type<tc>, window_params = [{transform_indices = @transform_0, window_bounds = array<i64: 12>}, {transform_indices = @transform_1, window_bounds = array<i64: 1, 8, 128>}, {transform_indices = @transform_2, window_bounds = array<i64: 1, 6, 128>}, {transform_indices = @transform_3, window_bounds = array<i64: 1, 8, 128>}]} {
    %c0_i32 = arith.constant 0 : i32
    %0 = arith.cmpi eq, %arg1, %c0_i32 : i32
    %1 = arith.extui %0 : i1 to i32
    %c0_i32_0 = arith.constant 0 : i32
    %2 = arith.cmpi ne, %1, %c0_i32_0 : i32
    scf.if %2 {
      %cst_47 = arith.constant 0.000000e+00 : f32
      %181 = vector.broadcast %cst_47 : f32 to vector<8x128xf32>
      %c0_48 = arith.constant 0 : index
      %c0_49 = arith.constant 0 : index
      %182 = vector.load %arg6[%c0_48, %c0_49] : memref<8x128xf32, #tpu.memory_space<vmem>>, vector<8x128xf32>
      tpu.vector_store %arg6[%c0_48, %c0_49], %181 {strides = array<i32>} : memref<8x128xf32, #tpu.memory_space<vmem>>, vector<8x128xf32>,
    } else {
    }
    %c0 = arith.constant 0 : index
    %c0_1 = arith.constant 0 : index
    %c0_2 = arith.constant 0 : index
    %3 = vector.load %arg3[%c0, %c0_1, %c0_2] : memref<1x8x128xf32, #tpu.memory_space<vmem>>, vector<1x8x128xf32>
    %4 = vector.shape_cast %3 : vector<1x8x128xf32> to vector<8x128xf32>
    %c0_3 = arith.constant 0 : index
    %c0_4 = arith.constant 0 : index
    %c0_5 = arith.constant 0 : index
    %5 = vector.load %arg4[%c0_3, %c0_4, %c0_5] : memref<1x6x128xf32, #tpu.memory_space<vmem>>, vector<1x6x128xf32>
    %6 = vector.shape_cast %5 : vector<1x6x128xf32> to vector<6x128xf32>
    %7 = arith.index_cast %arg0 : i32 to index
    %8 = memref.load %arg2[%7] : memref<12xf32, #tpu.memory_space<smem>>
    %c3_i32 = arith.constant 3 : i32
    %9 = arith.addi %c3_i32, %arg0 : i32
    %10 = arith.index_cast %9 : i32 to index
    %11 = memref.load %arg2[%10] : memref<12xf32, #tpu.memory_space<smem>>
    %c6_i32 = arith.constant 6 : i32
    %12 = arith.addi %c6_i32, %arg0 : i32
    %13 = arith.index_cast %12 : i32 to index
    %14 = memref.load %arg2[%13] : memref<12xf32, #tpu.memory_space<smem>>
    %c9_i32 = arith.constant 9 : i32
    %15 = arith.addi %c9_i32, %arg0 : i32
    %16 = arith.index_cast %15 : i32 to index
    %17 = memref.load %arg2[%16] : memref<12xf32, #tpu.memory_space<smem>>
    %18 = vector.extract_strided_slice %6 {offsets = [0, 0], sizes = [1, 128], strides = [1, 1]} : vector<6x128xf32> to vector<1x128xf32>
    %cst = arith.constant 1.000000e+00 : f32
    %19 = vector.broadcast %cst : f32 to vector<1x128xf32>
    %20 = arith.cmpf oeq, %18, %19 : vector<1x128xf32>
    %21 = arith.extui %20 : vector<1x128xi1> to vector<1x128xi32>
    %22 = arith.sitofp %21 : vector<1x128xi32> to vector<1x128xf32>
    %cst_6 = arith.constant 0.000000e+00 : f32
    %23 = vector.broadcast %cst_6 : f32 to vector<1x128xf32>
    %24 = arith.cmpf oeq, %18, %23 : vector<1x128xf32>
    %25 = arith.extui %24 : vector<1x128xi1> to vector<1x128xi32>
    %26 = arith.sitofp %25 : vector<1x128xi32> to vector<1x128xf32>
    %27 = vector.extract_strided_slice %4 {offsets = [0, 0], sizes = [1, 128], strides = [1, 1]} : vector<8x128xf32> to vector<1x128xf32>
    %28 = vector.extract_strided_slice %4 {offsets = [1, 0], sizes = [1, 128], strides = [1, 1]} : vector<8x128xf32> to vector<1x128xf32>
    %29 = arith.negf %28 : vector<1x128xf32>
    %30 = math.exp %29 : vector<1x128xf32>
    %cst_7 = arith.constant 1.000000e+00 : f32
    %31 = vector.broadcast %cst_7 : f32 to vector<1x128xf32>
    %32 = arith.addf %31, %30 : vector<1x128xf32>
    %33 = arith.divf %31, %32 : vector<1x128xf32>
    %34 = vector.extract_strided_slice %4 {offsets = [2, 0], sizes = [1, 128], strides = [1, 1]} : vector<8x128xf32> to vector<1x128xf32>
    %35 = arith.negf %34 : vector<1x128xf32>
    %36 = math.exp %35 : vector<1x128xf32>
    %cst_8 = arith.constant 1.000000e+00 : f32
    %37 = vector.broadcast %cst_8 : f32 to vector<1x128xf32>
    %38 = arith.addf %37, %36 : vector<1x128xf32>
    %39 = arith.divf %37, %38 : vector<1x128xf32>
    %40 = vector.extract_strided_slice %4 {offsets = [3, 0], sizes = [1, 128], strides = [1, 1]} : vector<8x128xf32> to vector<1x128xf32>
    %41 = math.exp %40 : vector<1x128xf32>
    %42 = vector.broadcast %8 : f32 to vector<1x128xf32>
    %43 = arith.mulf %41, %42 : vector<1x128xf32>
    %44 = vector.extract_strided_slice %4 {offsets = [4, 0], sizes = [1, 128], strides = [1, 1]} : vector<8x128xf32> to vector<1x128xf32>
    %45 = math.exp %44 : vector<1x128xf32>
    %46 = vector.broadcast %11 : f32 to vector<1x128xf32>
    %47 = arith.mulf %45, %46 : vector<1x128xf32>
    %48 = vector.extract_strided_slice %6 {offsets = [1, 0], sizes = [1, 128], strides = [1, 1]} : vector<6x128xf32> to vector<1x128xf32>
    %49 = vector.extract_strided_slice %6 {offsets = [2, 0], sizes = [1, 128], strides = [1, 1]} : vector<6x128xf32> to vector<1x128xf32>
    %50 = vector.extract_strided_slice %6 {offsets = [3, 0], sizes = [1, 128], strides = [1, 1]} : vector<6x128xf32> to vector<1x128xf32>
    %51 = vector.extract_strided_slice %6 {offsets = [4, 0], sizes = [1, 128], strides = [1, 1]} : vector<6x128xf32> to vector<1x128xf32>
    %cst_9 = arith.constant 5.000000e-01 : f32
    %52 = vector.broadcast %cst_9 : f32 to vector<1x128xf32>
    %53 = arith.mulf %52, %43 : vector<1x128xf32>
    %54 = arith.subf %33, %53 : vector<1x128xf32>
    %cst_10 = arith.constant 5.000000e-01 : f32
    %55 = vector.broadcast %cst_10 : f32 to vector<1x128xf32>
    %56 = arith.mulf %55, %43 : vector<1x128xf32>
    %57 = arith.addf %33, %56 : vector<1x128xf32>
    %cst_11 = arith.constant 5.000000e-01 : f32
    %58 = vector.broadcast %cst_11 : f32 to vector<1x128xf32>
    %59 = arith.mulf %58, %47 : vector<1x128xf32>
    %60 = arith.subf %39, %59 : vector<1x128xf32>
    %cst_12 = arith.constant 5.000000e-01 : f32
    %61 = vector.broadcast %cst_12 : f32 to vector<1x128xf32>
    %62 = arith.mulf %61, %47 : vector<1x128xf32>
    %63 = arith.addf %39, %62 : vector<1x128xf32>
    %cst_13 = arith.constant 5.000000e-01 : f32
    %64 = vector.broadcast %cst_13 : f32 to vector<1x128xf32>
    %65 = arith.mulf %64, %50 : vector<1x128xf32>
    %66 = arith.subf %48, %65 : vector<1x128xf32>
    %cst_14 = arith.constant 5.000000e-01 : f32
    %67 = vector.broadcast %cst_14 : f32 to vector<1x128xf32>
    %68 = arith.mulf %67, %50 : vector<1x128xf32>
    %69 = arith.addf %48, %68 : vector<1x128xf32>
    %cst_15 = arith.constant 5.000000e-01 : f32
    %70 = vector.broadcast %cst_15 : f32 to vector<1x128xf32>
    %71 = arith.mulf %70, %51 : vector<1x128xf32>
    %72 = arith.subf %49, %71 : vector<1x128xf32>
    %cst_16 = arith.constant 5.000000e-01 : f32
    %73 = vector.broadcast %cst_16 : f32 to vector<1x128xf32>
    %74 = arith.mulf %73, %51 : vector<1x128xf32>
    %75 = arith.addf %49, %74 : vector<1x128xf32>
    %76 = arith.minimumf %57, %69 : vector<1x128xf32>
    %77 = arith.maximumf %54, %66 : vector<1x128xf32>
    %78 = arith.subf %76, %77 : vector<1x128xf32>
    %cst_17 = arith.constant 0.000000e+00 : f32
    %79 = vector.broadcast %cst_17 : f32 to vector<1x128xf32>
    %80 = arith.maximumf %78, %79 : vector<1x128xf32>
    %81 = arith.minimumf %63, %75 : vector<1x128xf32>
    %82 = arith.maximumf %60, %72 : vector<1x128xf32>
    %83 = arith.subf %81, %82 : vector<1x128xf32>
    %cst_18 = arith.constant 0.000000e+00 : f32
    %84 = vector.broadcast %cst_18 : f32 to vector<1x128xf32>
    %85 = arith.maximumf %83, %84 : vector<1x128xf32>
    %86 = arith.mulf %80, %85 : vector<1x128xf32>
    %87 = arith.subf %57, %54 : vector<1x128xf32>
    %88 = arith.subf %63, %60 : vector<1x128xf32>
    %89 = arith.mulf %87, %88 : vector<1x128xf32>
    %90 = math.absf %89 : vector<1x128xf32>
    %91 = arith.subf %69, %66 : vector<1x128xf32>
    %92 = arith.subf %75, %72 : vector<1x128xf32>
    %93 = arith.mulf %91, %92 : vector<1x128xf32>
    %94 = math.absf %93 : vector<1x128xf32>
    %95 = arith.addf %90, %94 : vector<1x128xf32>
    %96 = arith.subf %95, %86 : vector<1x128xf32>
    %cst_19 = arith.constant 9.99999997E-7 : f32
    %97 = vector.broadcast %cst_19 : f32 to vector<1x128xf32>
    %98 = arith.addf %96, %97 : vector<1x128xf32>
    %99 = arith.divf %86, %98 : vector<1x128xf32>
    %cst_20 = arith.constant 0.000000e+00 : f32
    %100 = vector.broadcast %cst_20 : f32 to vector<1x128xf32>
    %101 = arith.maximumf %27, %100 : vector<1x128xf32>
    %102 = math.absf %27 : vector<1x128xf32>
    %cst_21 = arith.constant 0.000000e+00 : f32
    %103 = vector.broadcast %cst_21 : f32 to vector<1x128xf32>
    %104 = arith.subf %103, %102 : vector<1x128xf32>
    %105 = math.exp %104 : vector<1x128xf32>
    %106 = math.log1p %105 : vector<1x128xf32>
    %107 = arith.addf %101, %106 : vector<1x128xf32>
    %108 = arith.mulf %99, %18 : vector<1x128xf32>
    %109 = arith.mulf %27, %108 : vector<1x128xf32>
    %110 = arith.subf %107, %109 : vector<1x128xf32>
    %111 = vector.broadcast %14 : f32 to vector<1x128xf32>
    %112 = arith.mulf %50, %111 : vector<1x128xf32>
    %cst_22 = arith.constant 1.000000e-16 : f32
    %113 = vector.broadcast %cst_22 : f32 to vector<1x128xf32>
    %114 = arith.addf %113, %112 : vector<1x128xf32>
    %115 = math.log %114 : vector<1x128xf32>
    %116 = vector.broadcast %17 : f32 to vector<1x128xf32>
    %117 = arith.mulf %51, %116 : vector<1x128xf32>
    %cst_23 = arith.constant 1.000000e-16 : f32
    %118 = vector.broadcast %cst_23 : f32 to vector<1x128xf32>
    %119 = arith.addf %118, %117 : vector<1x128xf32>
    %120 = math.log %119 : vector<1x128xf32>
    %121 = arith.subf %33, %48 : vector<1x128xf32>
    %122 = arith.mulf %121, %121 : vector<1x128xf32>
    %123 = arith.subf %39, %49 : vector<1x128xf32>
    %124 = arith.mulf %123, %123 : vector<1x128xf32>
    %125 = arith.addf %122, %124 : vector<1x128xf32>
    %126 = vector.extract_strided_slice %4 {offsets = [3, 0], sizes = [1, 128], strides = [1, 1]} : vector<8x128xf32> to vector<1x128xf32>
    %127 = arith.subf %126, %115 : vector<1x128xf32>
    %128 = arith.mulf %127, %127 : vector<1x128xf32>
    %129 = arith.addf %125, %128 : vector<1x128xf32>
    %130 = vector.extract_strided_slice %4 {offsets = [4, 0], sizes = [1, 128], strides = [1, 1]} : vector<8x128xf32> to vector<1x128xf32>
    %131 = arith.subf %130, %120 : vector<1x128xf32>
    %132 = arith.mulf %131, %131 : vector<1x128xf32>
    %133 = arith.addf %129, %132 : vector<1x128xf32>
    %134 = vector.extract_strided_slice %4 {offsets = [5, 0], sizes = [3, 128], strides = [1, 1]} : vector<8x128xf32> to vector<3x128xf32>
    %135 = vector.extract_strided_slice %6 {offsets = [5, 0], sizes = [1, 128], strides = [1, 1]} : vector<6x128xf32> to vector<1x128xf32>
    %136 = arith.fptosi %135 : vector<1x128xf32> to vector<1x128xi32>
    %137 = tpu.iota {dimensions = array<i32: 0>} : vector<3x128xi32>
    %138 = vector.broadcast %136 : vector<1x128xi32> to vector<3x128xi32>
    %139 = arith.cmpi eq, %137, %138 : vector<3x128xi32>
    %cst_24 = arith.constant dense<0xFF800000> : vector<128xf32>
    %140 = vector.multi_reduction <maximumf>, %134, %cst_24 [0] : vector<3x128xf32> to vector<128xf32>
    %141 = vector.shape_cast %140 : vector<128xf32> to vector<1x128xf32>
    %142 = vector.broadcast %141 : vector<1x128xf32> to vector<3x128xf32>
    %143 = arith.subf %134, %142 : vector<3x128xf32>
    %144 = math.exp %143 : vector<3x128xf32>
    %cst_25 = arith.constant dense<0.000000e+00> : vector<128xf32>
    %145 = vector.multi_reduction <add>, %144, %cst_25 [0] : vector<3x128xf32> to vector<128xf32>
    %146 = vector.shape_cast %145 : vector<128xf32> to vector<1x128xf32>
    %147 = math.log %146 : vector<1x128xf32>
    %148 = arith.addf %141, %147 : vector<1x128xf32>
    %cst_26 = arith.constant 0.000000e+00 : f32
    %149 = vector.broadcast %cst_26 : f32 to vector<3x128xf32>
    %150 = arith.select %139, %134, %149 : vector<3x128xi1>, vector<3x128xf32>
    %cst_27 = arith.constant dense<0.000000e+00> : vector<128xf32>
    %151 = vector.multi_reduction <add>, %150, %cst_27 [0] : vector<3x128xf32> to vector<128xf32>
    %152 = vector.shape_cast %151 : vector<128xf32> to vector<1x128xf32>
    %153 = arith.subf %148, %152 : vector<1x128xf32>
    %cst_28 = arith.constant 1.000000e+00 : f32
    %154 = vector.broadcast %cst_28 : f32 to vector<1x128xf32>
    %155 = arith.mulf %154, %153 : vector<1x128xf32>
    %cst_29 = arith.constant 1.000000e+00 : f32
    %156 = vector.broadcast %cst_29 : f32 to vector<1x128xf32>
    %157 = arith.mulf %156, %110 : vector<1x128xf32>
    %158 = arith.addf %155, %157 : vector<1x128xf32>
    %cst_30 = arith.constant 2.500000e+00 : f32
    %159 = vector.broadcast %cst_30 : f32 to vector<1x128xf32>
    %160 = arith.mulf %159, %133 : vector<1x128xf32>
    %161 = arith.addf %158, %160 : vector<1x128xf32>
    %c0_31 = arith.constant 0 : index
    %c0_32 = arith.constant 0 : index
    %162 = vector.load %arg6[%c0_31, %c0_32] : memref<8x128xf32, #tpu.memory_space<vmem>>, vector<1x128xf32>
    %163 = arith.mulf %22, %161 : vector<1x128xf32>
    %164 = arith.addf %162, %163 : vector<1x128xf32>
    %c0_33 = arith.constant 0 : index
    %c0_34 = arith.constant 0 : index
    %165 = vector.load %arg6[%c0_33, %c0_34] : memref<8x128xf32, #tpu.memory_space<vmem>>, vector<1x128xf32>
    tpu.vector_store %arg6[%c0_33, %c0_34], %164 {strides = array<i32>} : memref<8x128xf32, #tpu.memory_space<vmem>>, vector<1x128xf32>,
    %c1 = arith.constant 1 : index
    %c0_35 = arith.constant 0 : index
    %166 = vector.load %arg6[%c1, %c0_35] : memref<8x128xf32, #tpu.memory_space<vmem>>, vector<1x128xf32>
    %cst_36 = arith.constant 1.000000e+01 : f32
    %167 = vector.broadcast %cst_36 : f32 to vector<1x128xf32>
    %168 = arith.mulf %167, %26 : vector<1x128xf32>
    %169 = arith.mulf %168, %107 : vector<1x128xf32>
    %170 = arith.addf %166, %169 : vector<1x128xf32>
    %c1_37 = arith.constant 1 : index
    %c0_38 = arith.constant 0 : index
    %171 = vector.load %arg6[%c1_37, %c0_38] : memref<8x128xf32, #tpu.memory_space<vmem>>, vector<1x128xf32>
    tpu.vector_store %arg6[%c1_37, %c0_38], %170 {strides = array<i32>} : memref<8x128xf32, #tpu.memory_space<vmem>>, vector<1x128xf32>,
    %c2 = arith.constant 2 : index
    %c0_39 = arith.constant 0 : index
    %172 = vector.load %arg6[%c2, %c0_39] : memref<8x128xf32, #tpu.memory_space<vmem>>, vector<1x128xf32>
    %173 = arith.addf %172, %22 : vector<1x128xf32>
    %c2_40 = arith.constant 2 : index
    %c0_41 = arith.constant 0 : index
    %174 = vector.load %arg6[%c2_40, %c0_41] : memref<8x128xf32, #tpu.memory_space<vmem>>, vector<1x128xf32>
    tpu.vector_store %arg6[%c2_40, %c0_41], %173 {strides = array<i32>} : memref<8x128xf32, #tpu.memory_space<vmem>>, vector<1x128xf32>,
    %c3 = arith.constant 3 : index
    %c0_42 = arith.constant 0 : index
    %175 = vector.load %arg6[%c3, %c0_42] : memref<8x128xf32, #tpu.memory_space<vmem>>, vector<1x128xf32>
    %176 = arith.addf %175, %26 : vector<1x128xf32>
    %c3_43 = arith.constant 3 : index
    %c0_44 = arith.constant 0 : index
    %177 = vector.load %arg6[%c3_43, %c0_44] : memref<8x128xf32, #tpu.memory_space<vmem>>, vector<1x128xf32>
    tpu.vector_store %arg6[%c3_43, %c0_44], %176 {strides = array<i32>} : memref<8x128xf32, #tpu.memory_space<vmem>>, vector<1x128xf32>,
    %c0_i32_45 = arith.constant 0 : i32
    %178 = arith.cmpi eq, %arg1, %c0_i32_45 : i32
    %179 = arith.extui %178 : i1 to i32
    %c0_i32_46 = arith.constant 0 : i32
    %180 = arith.cmpi ne, %179, %c0_i32_46 : i32
    scf.if %180 {
      %c0_47 = arith.constant 0 : index
      %c0_48 = arith.constant 0 : index
      %181 = vector.load %arg6[%c0_47, %c0_48] : memref<8x128xf32, #tpu.memory_space<vmem>>, vector<8x128xf32>
      %cst_49 = arith.constant dense<0.000000e+00> : vector<8xf32>
      %182 = vector.multi_reduction <add>, %181, %cst_49 [1] : vector<8x128xf32> to vector<8xf32>
      %183 = vector.shape_cast %182 : vector<8xf32> to vector<8x1xf32>
      %184 = vector.shape_cast %183 : vector<8x1xf32> to vector<1x8x1xf32>
      %185 = vector.shape_cast %184 : vector<1x8x1xf32> to vector<1x8x1xf32>
      %186 = vector.broadcast %185 : vector<1x8x1xf32> to vector<1x8x128xf32>
      %c0_50 = arith.constant 0 : index
      %c0_51 = arith.constant 0 : index
      %c0_52 = arith.constant 0 : index
      %187 = vector.load %arg5[%c0_50, %c0_51, %c0_52] : memref<1x8x128xf32, #tpu.memory_space<vmem>>, vector<1x8x128xf32>
      tpu.vector_store %arg5[%c0_50, %c0_51, %c0_52], %186 {strides = array<i32>} : memref<1x8x128xf32, #tpu.memory_space<vmem>>, vector<1x8x128xf32>,
    } else {
    }
    return
  }
  func.func @transform_0(%arg0: i32, %arg1: i32) -> i32 {
    %c0_i32 = arith.constant 0 : i32
    %c0_i32_0 = arith.constant 0 : i32
    return %c0_i32 : i32
  }
  func.func @transform_1(%arg0: i32, %arg1: i32) -> (i32, i32, i32) {
    %c0_i32 = arith.constant 0 : i32
    %c0_i32_0 = arith.constant 0 : i32
    return %arg0, %c0_i32, %arg1 : i32, i32, i32
  }
  func.func @transform_2(%arg0: i32, %arg1: i32) -> (i32, i32, i32) {
    %c0_i32 = arith.constant 0 : i32
    %c0_i32_0 = arith.constant 0 : i32
    return %arg0, %c0_i32, %arg1 : i32, i32, i32
  }
  func.func @transform_3(%arg0: i32, %arg1: i32) -> (i32, i32, i32) {
    %c0_i32 = arith.constant 0 : i32
    %c0_i32_0 = arith.constant 0 : i32
    %c0_i32_1 = arith.constant 0 : i32
    return %arg0, %c0_i32, %c0_i32_0 : i32, i32, i32
  }
}

</mosaic_0001>

<llo_original>
// kernel: yolo_loss.1
$region0: #{yolo_loss.1}
  #allocation0 [shape = 'u32[]', space=smem, size = 0x4, offset = 0x4, fixed_abs, tag = 'smem constant byte address 0x4 - core index']
  #allocation1 [shape = 'u32[144,128]{1,0:T(1,128)}', space=vmem, size = 0x12000, scoped, tag = 'internal scratch']
  #allocation2 [shape = 'f32[8,128]{1,0:T(8,128)}', space=vmem, size = 0x1000, scoped, tag = 'scratch operand']
  %s0 = inlined_call_operand.vmem [shape: f32[12], index: 0, kind: input, shape index: {}]
  %s1 = inlined_call_operand.vmem [shape: f32[3,8,128], index: 1, kind: input, shape index: {}]
  %s2 = inlined_call_operand.vmem [shape: f32[3,6,128], index: 2, kind: input, shape index: {}]
  %s3 = inlined_call_operand.vmem [shape: f32[3,8,128], index: 3, kind: output, shape index: {}]
  %s4 = sld [smem:[#allocation0]]
  $region57: #{yolo_loss.1} parent=0
    _
  %s6 = ssub.s32 1, %s4
  %s7 = scalar_select 0, %s6, %s4
  $region1: #{yolo_loss.1} parent=0
    #allocation3 [shape = 'u8[512]{0}', space=smem, size = 0x200, scoped, tag = 'input window, operand 0, single buffered']
    #allocation4 [shape = 's32[2]{0}', space=sflag, size = 0x8, scoped, tag = 'scoped memory for yolo_loss.1']
    %8 = vsyncpa [#allocation4], 0
    loop: start=0, step=1, limit=5
    $region2: #{yolo_loss.1} parent=1 // loop_pre_header
      _
    $region3: #{yolo_loss.1} parent=1 // loop_header
      %s10 = sphi 0, %s14
      %p11 = scmp.ge.s32.totalorder %s10, 5
      %s17 = sphi 0, %s29
      %s18 = sphi 0, %s25
      %s19 = sphi 0, %s17
      %s20 = sphi 0, %s18
      %s21 = sphi 0, %s19
      %s22 = sphi 0, %s20
      %s30 = sphi 0, %s30
      %s32 = sphi 0, %s30
      %s33 = sphi 0, %s32
      %s47 = sphi 0, %s33
      %s55 = sphi 0, %s57
      %s58 = sphi 0, %s55
      %s59 = sphi 0, %s58
      %s75 = sphi 0, %s59
      %s83 = sphi 0, %s85
      %s86 = sphi 0, %s83
      %s87 = sphi 0, %s86
      %s103 = sphi 0, %s87
      %s109 = sphi 0, %s111
      %s112 = sphi 0, %s109
      %s113 = sphi 0, %s112
      %s129 = sphi 0, %s113
    $region4: #{yolo_loss.1} parent=1 // loop_header_branch
      %13 = sbr.rel (%p11) target = $region8
    $region5: #{yolo_loss.1} parent=1 // loop_body
      %s15 = ssub.s32 %s10, 1
      %s16 = ssub.s32 %s10, 2
      %s23 = sadd.s32 1, %s18
      %p24 = scmp.ge.s32.totalorder %s23, 1
      %s25 = scalar_select %p24, 0, %s23
      %s26 = sadd.s32 1, %s17
      %s27 = scalar_select %p24, %s26, %s17
      %p28 = scmp.ge.s32.totalorder %s27, 3
      %s29 = scalar_select %p28, 0, %s27
      %s31 = sadd.s32 %s30, 1
      %p34 = scmp.eq.s32.totalorder %s10, 2
      %p35 = scmp.ne.s32.totalorder %s30, %s32
      %p36 = scmp.eq.s32.totalorder %s10, 0
      %p37 = por %p35, %p36
      %p38 = scmp.ne.s32.totalorder %s30, %s32
      %p39 = scmp.eq.s32.totalorder %s15, 2
      %p40 = por %p38, %p39
      %p41 = scmp.ne.s32.totalorder %s32, %s33
      %p42 = scmp.eq.s32.totalorder %s15, 0
      %p43 = por %p41, %p42
      %p44 = scmp.ne.s32.totalorder %s32, %s33
      %p45 = scmp.eq.s32.totalorder %s16, 2
      %p46 = por %p44, %p45
      %p48 = scmp.ne.s32.totalorder %s33, %s47
      %p49 = scmp.eq.s32.totalorder %s16, 0
      %p50 = por %p48, %p49
      %s51 = ssub.s32 %s17, %s29
      %s52 = ssub.s32 %s18, %s25
      %s53 = sor.u32 %s51, %s52
      %p54 = scmp.eq.s32.totalorder %s53, 0
      %s56 = sadd.s32 %s55, 1
      %s57 = scalar_select %p54, %s55, %s56
      %p60 = pneg %p54
      %p61 = scmp.eq.s32.totalorder %s10, 2
      %p62 = por %p60, %p61
      %p63 = scmp.ne.s32.totalorder %s55, %s58
      %p64 = scmp.eq.s32.totalorder %s10, 0
      %p65 = por %p63, %p64
      %p66 = scmp.ne.s32.totalorder %s55, %s58
      %p67 = scmp.eq.s32.totalorder %s15, 2
      %p68 = por %p66, %p67
      %p69 = scmp.ne.s32.totalorder %s58, %s59
      %p70 = scmp.eq.s32.totalorder %s15, 0
      %p71 = por %p69, %p70
      %p72 = scmp.ne.s32.totalorder %s58, %s59
      %p73 = scmp.eq.s32.totalorder %s16, 2
      %p74 = por %p72, %p73
      %p76 = scmp.ne.s32.totalorder %s59, %s75
      %p77 = scmp.eq.s32.totalorder %s16, 0
      %p78 = por %p76, %p77
      %s79 = ssub.s32 %s17, %s29
      %s80 = ssub.s32 %s18, %s25
      %s81 = sor.u32 %s79, %s80
      %p82 = scmp.eq.s32.totalorder %s81, 0
      %s84 = sadd.s32 %s83, 1
      %s85 = scalar_select %p82, %s83, %s84
      %p88 = pneg %p82
      %p89 = scmp.eq.s32.totalorder %s10, 2
      %p90 = por %p88, %p89
      %p91 = scmp.ne.s32.totalorder %s83, %s86
      %p92 = scmp.eq.s32.totalorder %s10, 0
      %p93 = por %p91, %p92
      %p94 = scmp.ne.s32.totalorder %s83, %s86
      %p95 = scmp.eq.s32.totalorder %s15, 2
      %p96 = por %p94, %p95
      %p97 = scmp.ne.s32.totalorder %s86, %s87
      %p98 = scmp.eq.s32.totalorder %s15, 0
      %p99 = por %p97, %p98
      %p100 = scmp.ne.s32.totalorder %s86, %s87
      %p101 = scmp.eq.s32.totalorder %s16, 2
      %p102 = por %p100, %p101
      %p104 = scmp.ne.s32.totalorder %s87, %s103
      %p105 = scmp.eq.s32.totalorder %s16, 0
      %p106 = por %p104, %p105
      %s107 = ssub.s32 %s17, %s29
      %p108 = scmp.eq.s32.totalorder %s107, 0
      %s110 = sadd.s32 %s109, 1
      %s111 = scalar_select %p108, %s109, %s110
      %p114 = pneg %p108
      %p115 = scmp.eq.s32.totalorder %s10, 2
      %p116 = por %p114, %p115
      %p117 = scmp.ne.s32.totalorder %s109, %s112
      %p118 = scmp.eq.s32.totalorder %s10, 0
      %p119 = por %p117, %p118
      %p120 = scmp.ne.s32.totalorder %s109, %s112
      %p121 = scmp.eq.s32.totalorder %s15, 2
      %p122 = por %p120, %p121
      %p123 = scmp.ne.s32.totalorder %s112, %s113
      %p124 = scmp.eq.s32.totalorder %s15, 0
      %p125 = por %p123, %p124
      %p126 = scmp.ne.s32.totalorder %s112, %s113
      %p127 = scmp.eq.s32.totalorder %s16, 2
      %p128 = por %p126, %p127
      %p130 = scmp.ne.s32.totalorder %s113, %s129
      %p131 = scmp.eq.s32.totalorder %s16, 0
      %p132 = por %p130, %p131
      %p133 = scmp.le.s32.totalorder 1, %s10
      %p134 = scmp.lt.s32.totalorder %s10, 4
      %p135 = pnand %p133, %p134
      %p136 = pneg %p135
      // Predicated region
      $region9: #{yolo_loss.1} parent=5 // pred_check
        _
      $region10: #{yolo_loss.1} parent=5 // pred_check_branch
        %138 = sbr.rel (%p135) target = $region12
      $region11: #{yolo_loss.1} parent=5 // pred_region
        %s139 = ssub.s32 %s10, 1
        // Predicated region
        $region13: #{yolo_loss.1} parent=11 // pred_check
          %p140 = pneg %p43
        $region14: #{yolo_loss.1} parent=11 // pred_check_branch
          %142 = sbr.rel (%p140) target = $region16
        $region15: #{yolo_loss.1} parent=11 // pred_region
          %s144 = ssub.s32 16, 16
          %145 = vsyncadd [#allocation4], %s144
          %s147 = sshll.u32 %s0, 4
          %s148 = int_to_ptr.vmem [resolvable:$true] %s147
          %150 = dma.vmem_to_smem %s148, 16, [#allocation3], [#allocation4]
        $region16: #{yolo_loss.1} parent=11 // pred_fallthru
          _
      $region12: #{yolo_loss.1} parent=5 // pred_fallthru
        _
      %p151 = scmp.lt.s32.totalorder %s10, 3
      // Predicated region
      $region17: #{yolo_loss.1} parent=5 // pred_check
        %p152 = pneg %p151
      $region18: #{yolo_loss.1} parent=5 // pred_check_branch
        %154 = sbr.rel (%p152) target = $region20
      $region19: #{yolo_loss.1} parent=5 // pred_region
        // Predicated region
        $region21: #{yolo_loss.1} parent=19 // pred_check
          %p155 = pneg %p65
        $region22: #{yolo_loss.1} parent=19 // pred_check_branch
          %157 = sbr.rel (%p155) target = $region24
        $region23: #{yolo_loss.1} parent=19 // pred_region
          %p158 = scmp.lt.s32.totalorder %s17, 2
          %s159 = scalar_select %p158, %s17, 2
          %p160 = scmp.lt.s32.totalorder %s18, 0
          %s161 = scalar_select %p160, %s18, 0
          %s162 = sadd.s32 %s161, %s159
          %s163 = smul.addr %s162, 8
          %s164 = scalar_lea.vmem %s1, %s163
        $region24: #{yolo_loss.1} parent=19 // pred_fallthru
          _
        // Predicated region
        $region25: #{yolo_loss.1} parent=19 // pred_check
          %p165 = pneg %p93
        $region26: #{yolo_loss.1} parent=19 // pred_check_branch
          %167 = sbr.rel (%p165) target = $region28
        $region27: #{yolo_loss.1} parent=19 // pred_region
          %p168 = scmp.lt.s32.totalorder %s17, 2
          %s169 = scalar_select %p168, %s17, 2
          %p170 = scmp.lt.s32.totalorder %s18, 0
          %s171 = scalar_select %p170, %s18, 0
          %s172 = sadd.s32 %s171, %s169
          %s173 = smul.addr %s172, 8
          %s174 = scalar_lea.vmem %s2, %s173
        $region28: #{yolo_loss.1} parent=19 // pred_fallthru
          _
      $region20: #{yolo_loss.1} parent=5 // pred_fallthru
        _
      %p175 = scmp.le.s32.totalorder 1, %s10
      %p176 = scmp.lt.s32.totalorder %s10, 4
      %p177 = pnand %p175, %p176
      %p178 = pneg %p177
      // Predicated region
      $region29: #{yolo_loss.1} parent=5 // pred_check
        _
      $region30: #{yolo_loss.1} parent=5 // pred_check_branch
        %180 = sbr.rel (%p177) target = $region32
      $region31: #{yolo_loss.1} parent=5 // pred_region
        %s181 = ssub.s32 %s10, 1
        // Predicated region
        $region33: #{yolo_loss.1} parent=31 // pred_check
          %p182 = pneg %p43
        $region34: #{yolo_loss.1} parent=31 // pred_check_branch
          %184 = sbr.rel (%p182) target = $region36
        $region35: #{yolo_loss.1} parent=31 // pred_region
          %185 = dma.done [#allocation4], 16
        $region36: #{yolo_loss.1} parent=31 // pred_fallthru
          _
        %186 = sfence
        %p187 = pneg %p43
        %p188 = pneg %p40
        %p189 = scmp.lt.s32.totalorder %s19, 2
        %s190 = scalar_select %p189, %s19, 2
        %p191 = scmp.lt.s32.totalorder %s20, 0
        %s192 = scalar_select %p191, %s20, 0
        %s193 = sadd.s32 %s192, %s190
        %s194 = smul.addr %s193, 8
        %s195 = scalar_lea.vmem %s1, %s194
        %p196 = pneg %p71
        %p197 = pneg %p68
        %p198 = scmp.lt.s32.totalorder %s19, 2
        %s199 = scalar_select %p198, %s19, 2
        %p200 = scmp.lt.s32.totalorder %s20, 0
        %s201 = scalar_select %p200, %s20, 0
        %s202 = sadd.s32 %s201, %s199
        %s203 = smul.addr %s202, 8
        %s204 = scalar_lea.vmem %s2, %s203
        %p205 = pneg %p99
        %p206 = pneg %p96
        %p207 = pneg %p125
        %p208 = pneg %p122
        %p209 = scmp.lt.s32.totalorder %s19, 2
        %s210 = scalar_select %p209, %s19, 2
        %s211 = smul.addr %s210, 8
        %s212 = scalar_lea.vmem %s3, %s211
        %p213 = scmp.lt.s32.totalorder %s19, 2
        %s214 = scalar_select %p213, %s19, 2
        %p215 = scmp.lt.s32.totalorder %s20, 0
        %s216 = scalar_select %p215, %s20, 0
        %s217 = sadd.s32 %s216, %s214
        %s218 = smul.addr %s217, 8
        %s219 = scalar_lea.vmem %s1, %s218
        %p220 = scmp.lt.s32.totalorder %s19, 2
        %s221 = scalar_select %p220, %s19, 2
        %p222 = scmp.lt.s32.totalorder %s20, 0
        %s223 = scalar_select %p222, %s20, 0
        %s224 = sadd.s32 %s223, %s221
        %s225 = smul.addr %s224, 8
        %s226 = scalar_lea.vmem %s2, %s225
        %p227 = scmp.lt.s32.totalorder %s19, 2
        %s228 = scalar_select %p227, %s19, 2
        %s229 = smul.addr %s228, 8
        %s230 = scalar_lea.vmem %s3, %s229
        %p231 = scmp.eq.s32.totalorder %s20, 0
        // Predicated region
        $region37: #{yolo_loss.1} parent=31 // pred_check
          %p232 = pneg %p231
        $region38: #{yolo_loss.1} parent=31 // pred_check_branch
          %234 = sbr.rel (%p232) target = $region40
        $region39: #{yolo_loss.1} parent=31 // pred_region
          %235 = vst [vmem:[#allocation2] sm:$0xff] 0.0
        $region40: #{yolo_loss.1} parent=31 // pred_fallthru
          _
        %v236 = vld [vmem:[%s219] sm:$0xff]
        %v237 = vld [vmem:[%s226] sm:$0x3f]
        %s238 = sld [smem:[#allocation3 + %s19]]
        %s239 = sadd.s32 %s19, 3
        %s240 = sld [smem:[#allocation3 + %s239]]
        %s241 = sadd.s32 %s19, 6
        %s242 = sld [smem:[#allocation3 + %s241]]
        %s243 = sadd.s32 %s19, 9
        %s244 = sld [smem:[#allocation3 + %s243]]
        %vm245 = vcmp.eq.f32.partialorder %v237, 1.0
        %v246 = vsel %vm245, 1, 0
        %v247 = vcvt.s32.f32 %v246
        %vm248 = vcmp.eq.f32.partialorder %v237, 0.0
        %v249 = vsel %vm248, 1, 0
        %v250 = vcvt.s32.f32 %v249
        %v251 = vxor.u32 %v236, 2147483648
        %v252 = vmul.f32 %v251, 1.442695
        %v253 = vpow.pop %v252
        %v254 = vadd.f32 %v253, 1.0
        %v255 = vrcp.pop %v254
        %v256 = vmul.f32 1.0, %v255
        %v257 = vmul.f32 %v236, 1.442695
        %v258 = vpow.pop %v257
        %v259 = vstv %s238
        %v260 = vmul.f32 %v258, %v259
        %v261 = vstv %s240
        %v262 = vmul.f32 %v258, %v261
        %v263 = vmul.f32 %v260, 0.5
        %v265 = vrot.slane %v263, 2
        %v267 = vsub.f32 %v256, %v265
        %v268 = vadd.f32 %v256, %v265
        %v269 = vmul.f32 %v262, 0.5
        %v271 = vrot.slane %v269, 2
        %v273 = vsub.f32 %v256, %v271
        %v274 = vadd.f32 %v256, %v271
        %v275 = vmul.f32 %v237, 0.5
        %v277 = vrot.slane %v275, 2
        %v279 = vsub.f32 %v237, %v277
        %v280 = vadd.f32 %v237, %v277
        %v281 = vmin.f32 %v268, %v280
        %v282 = vmax.f32 %v267, %v279
        %v283 = vsub.f32 %v281, %v282
        %v284 = vmax.f32 %v283, 0.0
        %v285 = vmin.f32 %v274, %v280
        %v286 = vmax.f32 %v273, %v279
        %v287 = vsub.f32 %v285, %v286
        %v288 = vmax.f32 %v287, 0.0
        %v290 = vrot.slane %v288, 1
        %v292 = vmul.f32 %v284, %v290
        %v293 = vsub.f32 %v268, %v267
        %v294 = vsub.f32 %v274, %v273
        %v296 = vrot.slane %v294, 1
        %v298 = vmul.f32 %v293, %v296
        %v299 = vand.u32 2147483647, %v298
        %v300 = vsub.f32 %v280, %v279
        %v302 = vrot.slane %v300, 1
        %v304 = vmul.f32 %v300, %v302
        %v305 = vand.u32 2147483647, %v304
        %v306 = vadd.f32 %v299, %v305
        %v307 = vsub.f32 %v306, %v292
        %v308 = vadd.f32 %v307, 1e-06
        %v309 = vrcp.pop %v308
        %v310 = vmul.f32 %v292, %v309
        %v311 = vmax.f32 %v236, 0.0
        %v312 = vand.u32 2147483647, %v236
        %v313 = vsub.f32 0.0, %v312
        %v314 = vmul.f32 %v313, 1.442695
        %v315 = vpow.pop %v314
        %v316 = vadd.f32 %v315, 1.0
        %v317 = vlog2.pop %v316
        %v318 = vmul.f32 %v317, 0.6931472
        %v319 = vmul.f32 -0.5, %v315
        %v320 = vadd.f32 %v319, 1.0
        %v321 = vmul.f32 %v320, %v315
        %v322 = vand.u32 2147483647, %v315
        %vm323 = vcmp.lt.f32.partialorder %v322, 0.0004427343
        %v324 = vsel %vm323, %v321, %v318
        %v325 = vadd.f32 %v311, %v324
        %v327 = vrot.slane %v237, 7
        %v329 = vmul.f32 %v310, %v327
        %v331 = vrot.slane %v329, 1
        %v333 = vmul.f32 %v236, %v331
        %v334 = vsub.f32 %v325, %v333
        %v335 = vstv %s242
        %v336 = vmul.f32 %v237, %v335
        %v337 = vadd.f32 %v336, 1e-16
        %v338 = vlog2.pop %v337
        %v339 = vmul.f32 %v338, 0.6931472
        %v340 = vstv %s244
        %v341 = vmul.f32 %v237, %v340
        %v342 = vadd.f32 %v341, 1e-16
        %v343 = vlog2.pop %v342
        %v344 = vmul.f32 %v343, 0.6931472
        %v345 = vsub.f32 %v256, %v237
        %v346 = vmul.f32 %v345, %v345
        %v348 = vrot.slane %v346, 1
        %v350 = vadd.f32 %v346, %v348
        %v351 = vsub.f32 %v236, %v339
        %v352 = vmul.f32 %v351, %v351
        %v354 = vrot.slane %v352, 2
        %v356 = vadd.f32 %v350, %v354
        %v357 = vsub.f32 %v236, %v344
        %v358 = vmul.f32 %v357, %v357
        %v360 = vrot.slane %v358, 3
        %v362 = vadd.f32 %v356, %v360
        %v363 = vcvt.f32.s32.to.zero.pseudo %v237
        %v364 = vlaneseq
        %v365 = vshrl.u32 %v364, 7
        %v366 = vlaneseq
        %v367 = vshrl.u32 %v366, 7
        %v368 = vsub.s32 5, %v367
        %v369 = vrot.slane %v363, %v368
        %vm370 = vcmp.eq.s32.totalorder %v365, %v369
        %vm371 = vcmask 1047557
        %v372 = vsel %vm371, %v236, -inf
        %v373 = vrot.slane %v372, 4
        %v374 = vmax.f32 %v372, %v373
        %v375 = vrot.slane %v374, 2
        %v376 = vmax.f32 %v374, %v375
        %v377 = vrot.slane %v376, 1
        %v378 = vmax.f32 %v376, %v377
        %v379 = vsub.f32 %v236, %v378
        %v380 = vmul.f32 %v379, 1.442695
        %v381 = vpow.pop %v380
        %v383 = vrot.slane %v381, 5
        %vm385 = vcmask 1042432
        %v386 = vsel %vm385, %v383, 0.0
        %v387 = vrot.slane %v386, 4
        %v388 = vadd.f32 %v386, %v387
        %v389 = vrot.slane %v388, 2
        %v390 = vadd.f32 %v388, %v389
        %v391 = vrot.slane %v390, 1
        %v392 = vadd.f32 %v390, %v391
        %v393 = vlog2.pop %v392
        %v394 = vmul.f32 %v393, 0.6931472
        %v395 = vadd.f32 %v378, %v394
        %v397 = vrot.slane %v236, 5
        %v399 = vsel %vm370, %v397, 0.0
        %v400 = vsel %vm385, %v399, 0.0
        %v401 = vrot.slane %v400, 4
        %v402 = vadd.f32 %v400, %v401
        %v403 = vrot.slane %v402, 2
        %v404 = vadd.f32 %v402, %v403
        %v405 = vrot.slane %v404, 1
        %v406 = vadd.f32 %v404, %v405
        %v407 = vsub.f32 %v395, %v406
        %v408 = vadd.f32 %v407, %v334
        %v409 = vmul.f32 %v362, 2.5
        %v411 = vrot.slane %v409, 1
        %v413 = vadd.f32 %v408, %v411
        %v414 = vld [vmem:[#allocation2] sm:$0x1]
        %v415 = vmul.f32 %v247, %v413
        %v416 = vadd.f32 %v414, %v415
        %417 = vst [vmem:[#allocation2] sm:$0x1] %v416
        %v418 = vld [vmem:[#allocation2 + $0x1] sm:$0x1]
        %v419 = vmul.f32 %v250, 10.0
        %v420 = vmul.f32 %v419, %v325
        %v421 = vadd.f32 %v418, %v420
        %422 = vst [vmem:[#allocation2 + $0x1] sm:$0x1] %v421
        %v423 = vld [vmem:[#allocation2 + $0x2] sm:$0x1]
        %v424 = vadd.f32 %v423, %v247
        %425 = vst [vmem:[#allocation2 + $0x2] sm:$0x1] %v424
        %v426 = vld [vmem:[#allocation2 + $0x3] sm:$0x1]
        %v427 = vadd.f32 %v426, %v250
        %428 = vst [vmem:[#allocation2 + $0x3] sm:$0x1] %v427
        // Predicated region
        $region41: #{yolo_loss.1} parent=31 // pred_check
          %p429 = pneg %p231
        $region42: #{yolo_loss.1} parent=31 // pred_check_branch
          %431 = sbr.rel (%p429) target = $region44
        $region43: #{yolo_loss.1} parent=31 // pred_region
          %v432 = vld [vmem:[#allocation2] sm:$0xff]
          %433 = vadd.xlane.f32.xlu0 %v432
          %v434 = vpop.xlane.xlu0 %433
          %435 = vst [vmem:[%s230] sm:$0xff] %v434
        $region44: #{yolo_loss.1} parent=31 // pred_fallthru
          _
        %p436 = scmp.lt.s32.totalorder %s19, 2
        %s437 = scalar_select %p436, %s19, 2
        %s438 = smul.addr %s437, 8
        %s439 = scalar_lea.vmem %s3, %s438
        // Predicated region
        $region45: #{yolo_loss.1} parent=31 // pred_check
          %p440 = pneg %p122
        $region46: #{yolo_loss.1} parent=31 // pred_check_branch
          %442 = sbr.rel (%p440) target = $region48
        $region47: #{yolo_loss.1} parent=31 // pred_region
          _
        $region48: #{yolo_loss.1} parent=31 // pred_fallthru
          _
      $region32: #{yolo_loss.1} parent=5 // pred_fallthru
        _
      %p443 = scmp.le.s32.totalorder 2, %s10
      // Predicated region
      $region49: #{yolo_loss.1} parent=5 // pred_check
        %p444 = pneg %p443
      $region50: #{yolo_loss.1} parent=5 // pred_check_branch
        %446 = sbr.rel (%p444) target = $region52
      $region51: #{yolo_loss.1} parent=5 // pred_region
        %s447 = ssub.s32 %s10, 2
        // Predicated region
        $region53: #{yolo_loss.1} parent=51 // pred_check
          %p448 = pneg %p128
        $region54: #{yolo_loss.1} parent=51 // pred_check_branch
          %450 = sbr.rel (%p448) target = $region56
        $region55: #{yolo_loss.1} parent=51 // pred_region
          %p451 = scmp.lt.s32.totalorder %s21, 2
          %s452 = scalar_select %p451, %s21, 2
          %s453 = smul.addr %s452, 8
          %s454 = scalar_lea.vmem %s3, %s453
        $region56: #{yolo_loss.1} parent=51 // pred_fallthru
          _
      $region52: #{yolo_loss.1} parent=5 // pred_fallthru
        _
    $region6: #{yolo_loss.1} parent=1 // loop_footer
      %s14 = sadd.s32 1, %s10
    $region7: #{yolo_loss.1} parent=1 // loop_footer_branch
      %9 = sbr.rel target = $region3
    $region8: #{yolo_loss.1} parent=1 // loop_exit
      _
    %455 = vsyncpa [#allocation4], 1
    %s456 = scalar_lea.sflag [#allocation4], 1
    %457 = vsyncpa %s456, 1

</llo_original>
